<compile_context>
chip_gen: v6e
topology: v6e:2x2x1
jax: 0.10.0
libtpu: 0.0.40
codegen_flags: <defaults>
</compile_context>

<pallas_src>
import functools

import jax
import jax.numpy as jnp
from jax.experimental import pallas as pl
from jax.experimental.pallas import tpu as pltpu


def _sigmoid(x):
    # exp runs on the EUP slot; keep the same formula in kernel and reference.
    return 1.0 / (1.0 + jnp.exp(-x))


def _decoder_kernel(x_ref, h_ref, c_ref, wih_ref, whh_ref, b_ref,
                    wconv_ref, bconv_ref,
                    out_ref, h_out_ref, c_out_ref, *, hidden):
    H = hidden
    x = x_ref[...].astype(jnp.float32)      # (TB, I)
    h = h_ref[...].astype(jnp.float32)      # (TB, H)
    c = c_ref[...].astype(jnp.float32)      # (TB, H)

    # LSTMCell gate pre-activations: two MXU dots with f32 accumulate, gate axis
    # (4H = 512) lane-dense.
    gates = (jnp.dot(x, wih_ref[...], preferred_element_type=jnp.float32)
             + jnp.dot(h, whh_ref[...], preferred_element_type=jnp.float32)
             + b_ref[...])                  # (TB, 4H)

    # PyTorch LSTMCell gate order: i, f, g, o.  H=128 -> lane-aligned static slices.
    i_g = _sigmoid(gates[:, 0 * H:1 * H])
    f_g = _sigmoid(gates[:, 1 * H:2 * H])
    g_g = jnp.tanh(gates[:, 2 * H:3 * H])
    o_g = _sigmoid(gates[:, 3 * H:4 * H])

    c_new = f_g * c + i_g * g_g
    h_new = o_g * jnp.tanh(c_new)

    h_out_ref[...] = h_new.astype(h_out_ref.dtype)
    c_out_ref[...] = c_new.astype(c_out_ref.dtype)

    # Decoder head on h_new: Dropout(0.1) is identity at inference, then
    # ReLU -> Conv1d(H, 1, k=1) over a length-1 sequence (== dot product) -> Sigmoid.
    # TODO(synk): training-mode Dropout mask (pltpu.prng_*) not implemented.
    act = jnp.maximum(h_new, 0.0)                                    # (TB, H)
    logit = jnp.sum(act * wconv_ref[...], axis=-1, keepdims=True)    # XLU reduce
    logit = logit + bconv_ref[...]                                   # (TB, 1)
    out_ref[...] = _sigmoid(logit).astype(out_ref.dtype)


def _pick_batch_tile(batch):
    # Tile over batch only when it splits into sublane-aligned tiles; otherwise
    # run the whole (small) batch in one grid step.
    for tb in (256, 128, 64, 32, 16, 8):
        if batch % tb == 0 and batch > tb:
            return tb
    return batch


def decoder_forward(x, h, c, w_ih, w_hh, b_ih, b_hh, conv_w, conv_b):
    """Fused Decoder forward (inference-mode dropout).

    x          : (B, input_size)
    h, c       : (B, hidden) or None (-> zeros, matching the torch module)
    w_ih       : (4*hidden, input_size)   -- torch nn.LSTMCell layout
    w_hh       : (4*hidden, hidden)
    b_ih, b_hh : (4*hidden,)
    conv_w     : (1, hidden, 1)           -- torch nn.Conv1d(hidden, 1, k=1) weight
    conv_b     : (1,)
    returns    : out (B, 1, 1), (h_new (B, hidden), c_new (B, hidden))
    """
    B, I = x.shape
    H = w_hh.shape[1]
    dtype = x.dtype

    if h is None:
        h = jnp.zeros((B, H), dtype)
    if c is None:
        c = jnp.zeros((B, H), dtype)

    # One-time weight plumbing: transpose so both gate matmuls are plain row-major
    # dots with the 4H gate axis on the lanes (4H % 128 == 0).  Biases pre-summed.
    wih_t = jnp.transpose(w_ih).astype(dtype)                 # (I, 4H)
    whh_t = jnp.transpose(w_hh).astype(dtype)                 # (H, 4H)
    bias = (b_ih + b_hh).reshape(1, 4 * H).astype(jnp.float32)
    wconv = conv_w.reshape(1, H).astype(jnp.float32)
    bconv = conv_b.reshape(1, 1).astype(jnp.float32)

    TB = _pick_batch_tile(B)
    grid = (B // TB,)

    kernel = functools.partial(_decoder_kernel, hidden=H)

    flops = 2 * B * (I + H) * 4 * H + 12 * B * H
    transcendentals = 6 * B * H
    bytes_accessed = 4 * (B * I + 4 * B * H + (I + H) * 4 * H + 4 * H + H + 1 + B)

    out2d, h_new, c_new = pl.pallas_call(
        kernel,
        out_shape=(
            jax.ShapeDtypeStruct((B, 1), dtype),
            jax.ShapeDtypeStruct((B, H), dtype),
            jax.ShapeDtypeStruct((B, H), dtype),
        ),
        grid_spec=pltpu.PrefetchScalarGridSpec(
            num_scalar_prefetch=0,
            grid=grid,
            in_specs=[
                pl.BlockSpec((TB, I), lambda b: (b, 0)),        # x
                pl.BlockSpec((TB, H), lambda b: (b, 0)),        # h
                pl.BlockSpec((TB, H), lambda b: (b, 0)),        # c
                pl.BlockSpec((I, 4 * H), lambda b: (0, 0)),     # W_ih^T
                pl.BlockSpec((H, 4 * H), lambda b: (0, 0)),     # W_hh^T
                pl.BlockSpec((1, 4 * H), lambda b: (0, 0)),     # b_ih + b_hh
                pl.BlockSpec((1, H), lambda b: (0, 0)),         # conv weight
                pl.BlockSpec((1, 1), lambda b: (0, 0)),         # conv bias
            ],
            out_specs=(
                pl.BlockSpec((TB, 1), lambda b: (b, 0)),        # sigmoid output
                pl.BlockSpec((TB, H), lambda b: (b, 0)),        # h_new
                pl.BlockSpec((TB, H), lambda b: (b, 0)),        # c_new
            ),
        ),
        compiler_params=pltpu.CompilerParams(
            dimension_semantics=("parallel",),
            vmem_limit_bytes=32 * 1024 * 1024,
        ),
        cost_estimate=pl.CostEstimate(
            flops=flops,
            transcendentals=transcendentals,
            bytes_accessed=bytes_accessed,
        ),
    )(x, h, c, wih_t, whh_t, bias, wconv, bconv)

    return out2d.reshape(B, 1, 1), (h_new, c_new)


def _reference_forward(x, h, c, w_ih, w_hh, b_ih, b_hh, conv_w, conv_b):
    """Pure-JAX reference matching torch semantics (dropout = identity)."""
    B = x.shape[0]
    H = w_hh.shape[1]
    if h is None:
        h = jnp.zeros((B, H), x.dtype)
    if c is None:
        c = jnp.zeros((B, H), x.dtype)
    gates = x @ w_ih.T + b_ih + h @ w_hh.T + b_hh
    i_g = _sigmoid(gates[:, 0 * H:1 * H])
    f_g = _sigmoid(gates[:, 1 * H:2 * H])
    g_g = jnp.tanh(gates[:, 2 * H:3 * H])
    o_g = _sigmoid(gates[:, 3 * H:4 * H])
    c_new = f_g * c + i_g * g_g
    h_new = o_g * jnp.tanh(c_new)
    act = jnp.maximum(h_new, 0.0)
    logit = act @ conv_w.reshape(1, H).T + conv_b          # (B, 1)
    out = _sigmoid(logit).reshape(B, 1, 1)
    return out, (h_new, c_new)


if __name__ == "__main__":
    # Shapes implied by the module: x is (batch, input_size); the default hidden
    # state is hard-coded to width 128, so hidden_size = 128.
    B, input_size, hidden_size = 2, 64, 128

    key = jax.random.PRNGKey(0)
    kx, k1, k2, k3, k4, k5, k6 = jax.random.split(key, 7)
    s = 0.1
    x = jax.random.normal(kx, (B, input_size), dtype=jnp.float32)
    w_ih = s * jax.random.normal(k1, (4 * hidden_size, input_size), jnp.float32)
    w_hh = s * jax.random.normal(k2, (4 * hidden_size, hidden_size), jnp.float32)
    b_ih = s * jax.random.normal(k3, (4 * hidden_size,), jnp.float32)
    b_hh = s * jax.random.normal(k4, (4 * hidden_size,), jnp.float32)
    conv_w = s * jax.random.normal(k5, (1, hidden_size, 1), jnp.float32)
    conv_b = s * jax.random.normal(k6, (1,), jnp.float32)

    out, (h_new, c_new) = decoder_forward(x, None, None, w_ih, w_hh,
                                          b_ih, b_hh, conv_w, conv_b)
    out = jax.block_until_ready(out)

    ref_out, (ref_h, ref_c) = _reference_forward(x, None, None, w_ih, w_hh,
                                                 b_ih, b_hh, conv_w, conv_b)
    assert out.shape == (B, 1, 1), out.shape
    assert h_new.shape == (B, hidden_size) and c_new.shape == (B, hidden_size)
    assert jnp.allclose(out, ref_out, atol=1e-5, rtol=1e-5), \
        float(jnp.max(jnp.abs(out - ref_out)))
    assert jnp.allclose(h_new, ref_h, atol=1e-5, rtol=1e-5), \
        float(jnp.max(jnp.abs(h_new - ref_h)))
    assert jnp.allclose(c_new, ref_c, atol=1e-5, rtol=1e-5), \
        float(jnp.max(jnp.abs(c_new - ref_c)))

    print("KERNEL_OK")
</pallas_src>

<mosaic_0001>
module attributes {stable_mosaic.version = 11 : i64} {
  func.func @_decoder_kernel(%arg0: i32, %arg1: memref<2x64xf32, #tpu.memory_space<vmem>>, %arg2: memref<2x128xf32, #tpu.memory_space<vmem>>, %arg3: memref<2x128xf32, #tpu.memory_space<vmem>>, %arg4: memref<64x512xf32, #tpu.memory_space<vmem>>, %arg5: memref<128x512xf32, #tpu.memory_space<vmem>>, %arg6: memref<1x512xf32, #tpu.memory_space<vmem>>, %arg7: memref<1x128xf32, #tpu.memory_space<vmem>>, %arg8: memref<1x1xf32, #tpu.memory_space<vmem>>, %arg9: memref<2x1xf32, #tpu.memory_space<vmem>>, %arg10: memref<2x128xf32, #tpu.memory_space<vmem>>, %arg11: memref<2x128xf32, #tpu.memory_space<vmem>>) attributes {dimension_semantics = [#tpu.dimension_semantics<parallel>], iteration_bounds = array<i64: 1>, scalar_prefetch = 0 : i64, scratch_operands = 0 : i64, tpu.core_type = #tpu.core_type<tc>, window_params = [{transform_indices = @transform_0, window_bounds = array<i64: 2, 64>}, {transform_indices = @transform_1, window_bounds = array<i64: 2, 128>}, {transform_indices = @transform_2, window_bounds = array<i64: 2, 128>}, {pipeline_mode = #tpu.pipeline_mode<synchronous>, transform_indices = @transform_3, window_bounds = array<i64: 64, 512>}, {pipeline_mode = #tpu.pipeline_mode<synchronous>, transform_indices = @transform_4, window_bounds = array<i64: 128, 512>}, {pipeline_mode = #tpu.pipeline_mode<synchronous>, transform_indices = @transform_5, window_bounds = array<i64: 1, 512>}, {pipeline_mode = #tpu.pipeline_mode<synchronous>, transform_indices = @transform_6, window_bounds = array<i64: 1, 128>}, {pipeline_mode = #tpu.pipeline_mode<synchronous>, transform_indices = @transform_7, window_bounds = array<i64: 1, 1>}, {transform_indices = @transform_8, window_bounds = array<i64: 2, 1>}, {transform_indices = @transform_9, window_bounds = array<i64: 2, 128>}, {transform_indices = @transform_10, window_bounds = array<i64: 2, 128>}]} {
    %c0 = arith.constant 0 : index
    %c0_0 = arith.constant 0 : index
    %0 = vector.load %arg1[%c0, %c0_0] : memref<2x64xf32, #tpu.memory_space<vmem>>, vector<2x64xf32>
    %c0_1 = arith.constant 0 : index
    %c0_2 = arith.constant 0 : index
    %1 = vector.load %arg2[%c0_1, %c0_2] : memref<2x128xf32, #tpu.memory_space<vmem>>, vector<2x128xf32>
    %c0_3 = arith.constant 0 : index
    %c0_4 = arith.constant 0 : index
    %2 = vector.load %arg3[%c0_3, %c0_4] : memref<2x128xf32, #tpu.memory_space<vmem>>, vector<2x128xf32>
    %c0_5 = arith.constant 0 : index
    %c0_6 = arith.constant 0 : index
    %3 = vector.load %arg4[%c0_5, %c0_6] : memref<64x512xf32, #tpu.memory_space<vmem>>, vector<64x512xf32>
    %cst = arith.constant dense<0.000000e+00> : vector<2x512xf32>
    %4 = tpu.matmul %0, %3, %cst {dimension_numbers = #tpu.dot_dimension_numbers<[1], [0], [0], [1], [0, 0, 1, 1], [], []>} : vector<2x64xf32>, vector<64x512xf32>, vector<2x512xf32> -> vector<2x512xf32>
    %c0_7 = arith.constant 0 : index
    %c0_8 = arith.constant 0 : index
    %5 = vector.load %arg5[%c0_7, %c0_8] : memref<128x512xf32, #tpu.memory_space<vmem>>, vector<128x512xf32>
    %cst_9 = arith.constant dense<0.000000e+00> : vector<2x512xf32>
    %6 = tpu.matmul %1, %5, %cst_9 {dimension_numbers = #tpu.dot_dimension_numbers<[1], [0], [0], [1], [0, 0, 1, 1], [], []>} : vector<2x128xf32>, vector<128x512xf32>, vector<2x512xf32> -> vector<2x512xf32>
    %7 = arith.addf %4, %6 : vector<2x512xf32>
    %c0_10 = arith.constant 0 : index
    %c0_11 = arith.constant 0 : index
    %8 = vector.load %arg6[%c0_10, %c0_11] : memref<1x512xf32, #tpu.memory_space<vmem>>, vector<1x512xf32>
    %9 = vector.broadcast %8 : vector<1x512xf32> to vector<2x512xf32>
    %10 = arith.addf %7, %9 : vector<2x512xf32>
    %11 = vector.extract_strided_slice %10 {offsets = [0, 0], sizes = [2, 128], strides = [1, 1]} : vector<2x512xf32> to vector<2x128xf32>
    %cst_12 = arith.constant 0.000000e+00 : f32
    %12 = vector.broadcast %cst_12 : f32 to vector<2x128xf32>
    %13 = arith.subf %12, %11 : vector<2x128xf32>
    %14 = math.exp %13 : vector<2x128xf32>
    %cst_13 = arith.constant 1.000000e+00 : f32
    %15 = vector.broadcast %cst_13 : f32 to vector<2x128xf32>
    %16 = arith.addf %15, %14 : vector<2x128xf32>
    %cst_14 = arith.constant 1.000000e+00 : f32
    %17 = vector.broadcast %cst_14 : f32 to vector<2x128xf32>
    %18 = arith.divf %17, %16 : vector<2x128xf32>
    %19 = vector.extract_strided_slice %10 {offsets = [0, 128], sizes = [2, 128], strides = [1, 1]} : vector<2x512xf32> to vector<2x128xf32>
    %cst_15 = arith.constant 0.000000e+00 : f32
    %20 = vector.broadcast %cst_15 : f32 to vector<2x128xf32>
    %21 = arith.subf %20, %19 : vector<2x128xf32>
    %22 = math.exp %21 : vector<2x128xf32>
    %cst_16 = arith.constant 1.000000e+00 : f32
    %23 = vector.broadcast %cst_16 : f32 to vector<2x128xf32>
    %24 = arith.addf %23, %22 : vector<2x128xf32>
    %cst_17 = arith.constant 1.000000e+00 : f32
    %25 = vector.broadcast %cst_17 : f32 to vector<2x128xf32>
    %26 = arith.divf %25, %24 : vector<2x128xf32>
    %27 = vector.extract_strided_slice %10 {offsets = [0, 256], sizes = [2, 128], strides = [1, 1]} : vector<2x512xf32> to vector<2x128xf32>
    %28 = math.tanh %27 : vector<2x128xf32>
    %29 = vector.extract_strided_slice %10 {offsets = [0, 384], sizes = [2, 128], strides = [1, 1]} : vector<2x512xf32> to vector<2x128xf32>
    %cst_18 = arith.constant 0.000000e+00 : f32
    %30 = vector.broadcast %cst_18 : f32 to vector<2x128xf32>
    %31 = arith.subf %30, %29 : vector<2x128xf32>
    %32 = math.exp %31 : vector<2x128xf32>
    %cst_19 = arith.constant 1.000000e+00 : f32
    %33 = vector.broadcast %cst_19 : f32 to vector<2x128xf32>
    %34 = arith.addf %33, %32 : vector<2x128xf32>
    %cst_20 = arith.constant 1.000000e+00 : f32
    %35 = vector.broadcast %cst_20 : f32 to vector<2x128xf32>
    %36 = arith.divf %35, %34 : vector<2x128xf32>
    %37 = arith.mulf %26, %2 : vector<2x128xf32>
    %38 = arith.mulf %18, %28 : vector<2x128xf32>
    %39 = arith.addf %37, %38 : vector<2x128xf32>
    %40 = math.tanh %39 : vector<2x128xf32>
    %41 = arith.mulf %36, %40 : vector<2x128xf32>
    %c0_21 = arith.constant 0 : index
    %c0_22 = arith.constant 0 : index
    %42 = vector.load %arg10[%c0_21, %c0_22] : memref<2x128xf32, #tpu.memory_space<vmem>>, vector<2x128xf32>
    tpu.vector_store %arg10[%c0_21, %c0_22], %41 {strides = array<i32>} : memref<2x128xf32, #tpu.memory_space<vmem>>, vector<2x128xf32>,
    %c0_23 = arith.constant 0 : index
    %c0_24 = arith.constant 0 : index
    %43 = vector.load %arg11[%c0_23, %c0_24] : memref<2x128xf32, #tpu.memory_space<vmem>>, vector<2x128xf32>
    tpu.vector_store %arg11[%c0_23, %c0_24], %39 {strides = array<i32>} : memref<2x128xf32, #tpu.memory_space<vmem>>, vector<2x128xf32>,
    %cst_25 = arith.constant 0.000000e+00 : f32
    %44 = vector.broadcast %cst_25 : f32 to vector<2x128xf32>
    %45 = arith.maximumf %41, %44 : vector<2x128xf32>
    %c0_26 = arith.constant 0 : index
    %c0_27 = arith.constant 0 : index
    %46 = vector.load %arg7[%c0_26, %c0_27] : memref<1x128xf32, #tpu.memory_space<vmem>>, vector<1x128xf32>
    %47 = vector.broadcast %46 : vector<1x128xf32> to vector<2x128xf32>
    %48 = arith.mulf %45, %47 : vector<2x128xf32>
    %cst_28 = arith.constant dense<0.000000e+00> : vector<2xf32>
    %49 = vector.multi_reduction <add>, %48, %cst_28 [1] : vector<2x128xf32> to vector<2xf32>
    %50 = vector.shape_cast %49 : vector<2xf32> to vector<2x1xf32>
    %c0_29 = arith.constant 0 : index
    %c0_30 = arith.constant 0 : index
    %51 = vector.load %arg8[%c0_29, %c0_30] : memref<1x1xf32, #tpu.memory_space<vmem>>, vector<1x1xf32>
    %52 = vector.broadcast %51 : vector<1x1xf32> to vector<2x1xf32>
    %53 = arith.addf %50, %52 : vector<2x1xf32>
    %cst_31 = arith.constant 0.000000e+00 : f32
    %54 = vector.broadcast %cst_31 : f32 to vector<2x1xf32>
    %55 = arith.subf %54, %53 : vector<2x1xf32>
    %56 = math.exp %55 : vector<2x1xf32>
    %cst_32 = arith.constant 1.000000e+00 : f32
    %57 = vector.broadcast %cst_32 : f32 to vector<2x1xf32>
    %58 = arith.addf %57, %56 : vector<2x1xf32>
    %cst_33 = arith.constant 1.000000e+00 : f32
    %59 = vector.broadcast %cst_33 : f32 to vector<2x1xf32>
    %60 = arith.divf %59, %58 : vector<2x1xf32>
    %c0_34 = arith.constant 0 : index
    %c0_35 = arith.constant 0 : index
    %61 = vector.load %arg9[%c0_34, %c0_35] : memref<2x1xf32, #tpu.memory_space<vmem>>, vector<2x1xf32>
    tpu.vector_store %arg9[%c0_34, %c0_35], %60 {strides = array<i32>} : memref<2x1xf32, #tpu.memory_space<vmem>>, vector<2x1xf32>,
    return
  }
  func.func @transform_0(%arg0: i32) -> (i32, i32) {
    %c0_i32 = arith.constant 0 : i32
    %c0_i32_0 = arith.constant 0 : i32
    return %arg0, %c0_i32 : i32, i32
  }
  func.func @transform_1(%arg0: i32) -> (i32, i32) {
    %c0_i32 = arith.constant 0 : i32
    %c0_i32_0 = arith.constant 0 : i32
    return %arg0, %c0_i32 : i32, i32
  }
  func.func @transform_2(%arg0: i32) -> (i32, i32) {
    %c0_i32 = arith.constant 0 : i32
    %c0_i32_0 = arith.constant 0 : i32
    return %arg0, %c0_i32 : i32, i32
  }
  func.func @transform_3(%arg0: i32) -> (i32, i32) {
    %c0_i32 = arith.constant 0 : i32
    %c0_i32_0 = arith.constant 0 : i32
    %c0_i32_1 = arith.constant 0 : i32
    return %c0_i32, %c0_i32_0 : i32, i32
  }
  func.func @transform_4(%arg0: i32) -> (i32, i32) {
    %c0_i32 = arith.constant 0 : i32
    %c0_i32_0 = arith.constant 0 : i32
    %c0_i32_1 = arith.constant 0 : i32
    return %c0_i32, %c0_i32_0 : i32, i32
  }
  func.func @transform_5(%arg0: i32) -> (i32, i32) {
    %c0_i32 = arith.constant 0 : i32
    %c0_i32_0 = arith.constant 0 : i32
    %c0_i32_1 = arith.constant 0 : i32
    return %c0_i32, %c0_i32_0 : i32, i32
  }
  func.func @transform_6(%arg0: i32) -> (i32, i32) {
    %c0_i32 = arith.constant 0 : i32
    %c0_i32_0 = arith.constant 0 : i32
    %c0_i32_1 = arith.constant 0 : i32
    return %c0_i32, %c0_i32_0 : i32, i32
  }
  func.func @transform_7(%arg0: i32) -> (i32, i32) {
    %c0_i32 = arith.constant 0 : i32
    %c0_i32_0 = arith.constant 0 : i32
    %c0_i32_1 = arith.constant 0 : i32
    return %c0_i32, %c0_i32_0 : i32, i32
  }
  func.func @transform_8(%arg0: i32) -> (i32, i32) {
    %c0_i32 = arith.constant 0 : i32
    %c0_i32_0 = arith.constant 0 : i32
    return %arg0, %c0_i32 : i32, i32
  }
  func.func @transform_9(%arg0: i32) -> (i32, i32) {
    %c0_i32 = arith.constant 0 : i32
    %c0_i32_0 = arith.constant 0 : i32
    return %arg0, %c0_i32 : i32, i32
  }
  func.func @transform_10(%arg0: i32) -> (i32, i32) {
    %c0_i32 = arith.constant 0 : i32
    %c0_i32_0 = arith.constant 0 : i32
    return %arg0, %c0_i32 : i32, i32
  }
}

</mosaic_0001>

<llo_original>
// kernel: tpu_custom_call.1
$region0: #{tpu_custom_call.1}
  #allocation0 [shape = 'u32[]', space=smem, size = 0x4, offset = 0x4, fixed_abs, tag = 'smem constant byte address 0x4 - core index']
  #allocation1 [shape = 'u32[144,128]{1,0:T(1,128)}', space=vmem, size = 0x12000, scoped, tag = 'internal scratch']
  #allocation2 [shape = 'f32[1,1]{1,0:T(1,128)S(1)}', space=vmem, size = 0x200, scoped, tag = 'scoped memory for tpu_custom_call.1']
  %s0 = inlined_call_operand.vmem [shape: f32[2,64], index: 0, kind: input, shape index: {}]
  %s1 = inlined_call_operand.hbm [shape: f32[2,128], index: 1, kind: input, shape index: {}]
  %s2 = inlined_call_operand.hbm [shape: f32[2,128], index: 2, kind: input, shape index: {}]
  %s3 = inlined_call_operand.hbm [shape: f32[64,512], index: 3, kind: input, shape index: {}]
  %s4 = inlined_call_operand.hbm [shape: f32[128,512], index: 4, kind: input, shape index: {}]
  %s5 = inlined_call_operand.vmem [shape: f32[1,512], index: 5, kind: input, shape index: {}]
  %s6 = inlined_call_operand.vmem [shape: f32[1,128], index: 6, kind: input, shape index: {}]
  %s7 = inlined_call_operand.<no memory space> [shape: f32[1,1], index: 7, kind: input, shape index: {}]
  %s8 = inlined_call_operand.vmem [shape: f32[2,1], index: 8, kind: output, shape index: {0}]
  %s9 = inlined_call_operand.hbm [shape: f32[2,128], index: 9, kind: output, shape index: {1}]
  %s10 = inlined_call_operand.hbm [shape: f32[2,128], index: 10, kind: output, shape index: {2}]
  %11 = xla_tuple %s8, %s9, %s10
  %s12 = sld [smem:[#allocation0]]
  $region74: #{tpu_custom_call.1} parent=0
    _
  %s14 = ssub.s32 1, %s12
  %s15 = scalar_select 0, %s14, %s12
  %v16 = vstv %s7
  %17 = vst [vmem:[#allocation2] sm:$0x1] %v16
  $region1: #{tpu_custom_call.1} parent=0
    #allocation3 [shape = 'u8[1024]{0}', space=vmem, size = 0x400, scoped, tag = 'input window, operand 1, single buffered']
    #allocation4 [shape = 's32[1]{0}', space=sflag, size = 0x4, scoped, tag = 'scoped memory for tpu_custom_call.1']
    #allocation5 [shape = 's32[1]{0}', space=sflag, size = 0x4, scoped, tag = 'scoped memory for tpu_custom_call.1']
    #allocation6 [shape = 'u8[1024]{0}', space=vmem, size = 0x400, scoped, tag = 'input window, operand 2, single buffered']
    #allocation7 [shape = 's32[1]{0}', space=sflag, size = 0x4, scoped, tag = 'scoped memory for tpu_custom_call.1']
    #allocation8 [shape = 'u8[131072]{0}', space=vmem, size = 0x20000, scoped, tag = 'input window, operand 3, single buffered']
    #allocation9 [shape = 'u8[262144]{0}', space=vmem, size = 0x40000, scoped, tag = 'input window, operand 4, single buffered']
    #allocation10 [shape = 's32[1]{0}', space=sflag, size = 0x4, scoped, tag = 'scoped memory for tpu_custom_call.1']
    #allocation11 [shape = 'u8[1024]{0}', space=vmem, size = 0x400, scoped, tag = 'output window, operand 1, single buffered']
    #allocation12 [shape = 'u8[1024]{0}', space=vmem, size = 0x400, scoped, tag = 'output window, operand 2, single buffered']
    #allocation13 [shape = 's32[1]{0}', space=sflag, size = 0x4, scoped, tag = 'scoped memory for tpu_custom_call.1']
    %18 = vsyncpa [#allocation4], 0
    %19 = vsyncpa [#allocation7], 0
    %20 = vsyncpa [#allocation10], 0
    %21 = vsyncpa [#allocation5], 0
    %22 = vsyncpa [#allocation13], 0
    // Predicated region
    $region2: #{tpu_custom_call.1} parent=1 // pred_check
      _
    $region3: #{tpu_custom_call.1} parent=1 // pred_check_branch
      %24 = sbr.rel (0) target = $region5
    $region4: #{tpu_custom_call.1} parent=1 // pred_region
      _
    $region5: #{tpu_custom_call.1} parent=1 // pred_fallthru
      _
    // Predicated region
    $region6: #{tpu_custom_call.1} parent=1 // pred_check
      _
    $region7: #{tpu_custom_call.1} parent=1 // pred_check_branch
      %26 = sbr.rel (0) target = $region9
    $region8: #{tpu_custom_call.1} parent=1 // pred_region
      %s28 = ssub.s32 32, 32
      %29 = vsyncadd [#allocation4], %s28
      %s31 = sshll.u32 [#allocation3], 4
      %s32 = int_to_ptr.vmem [resolvable:$true] %s31
      %34 = dma.hbm_to_vmem [thread:$0]  %s1, 32, %s32, [#allocation4]
    $region9: #{tpu_custom_call.1} parent=1 // pred_fallthru
      _
    // Predicated region
    $region10: #{tpu_custom_call.1} parent=1 // pred_check
      _
    $region11: #{tpu_custom_call.1} parent=1 // pred_check_branch
      %36 = sbr.rel (0) target = $region13
    $region12: #{tpu_custom_call.1} parent=1 // pred_region
      %s38 = ssub.s32 32, 32
      %39 = vsyncadd [#allocation7], %s38
      %s41 = sshll.u32 [#allocation6], 4
      %s42 = int_to_ptr.vmem [resolvable:$true] %s41
      %44 = dma.hbm_to_vmem [thread:$0]  %s2, 32, %s42, [#allocation7]
    $region13: #{tpu_custom_call.1} parent=1 // pred_fallthru
      _
    // Predicated region
    $region14: #{tpu_custom_call.1} parent=1 // pred_check
      _
    $region15: #{tpu_custom_call.1} parent=1 // pred_check_branch
      %46 = sbr.rel (0) target = $region17
    $region16: #{tpu_custom_call.1} parent=1 // pred_region
      %s48 = ssub.s32 4096, 4096
      %49 = vsyncadd [#allocation7], %s48
      %s50 = sshll.u32 [#allocation8], 4
      %s51 = int_to_ptr.vmem [resolvable:$true] %s50
      %56 = dma.hbm_to_vmem [thread:$0]  %s3, 4096, %s51, [#allocation7], 512, 512, 32
    $region17: #{tpu_custom_call.1} parent=1 // pred_fallthru
      _
    // Predicated region
    $region18: #{tpu_custom_call.1} parent=1 // pred_check
      _
    $region19: #{tpu_custom_call.1} parent=1 // pred_check_branch
      %58 = sbr.rel (0) target = $region21
    $region20: #{tpu_custom_call.1} parent=1 // pred_region
      %s60 = ssub.s32 8192, 8192
      %61 = vsyncadd [#allocation10], %s60
      %s62 = sshll.u32 [#allocation9], 4
      %s63 = int_to_ptr.vmem [resolvable:$true] %s62
      %68 = dma.hbm_to_vmem [thread:$0]  %s4, 8192, %s63, [#allocation10], 512, 512, 32
    $region21: #{tpu_custom_call.1} parent=1 // pred_fallthru
      _
    // Predicated region
    $region22: #{tpu_custom_call.1} parent=1 // pred_check
      _
    $region23: #{tpu_custom_call.1} parent=1 // pred_check_branch
      %70 = sbr.rel (0) target = $region25
    $region24: #{tpu_custom_call.1} parent=1 // pred_region
      _
    $region25: #{tpu_custom_call.1} parent=1 // pred_fallthru
      _
    // Predicated region
    $region26: #{tpu_custom_call.1} parent=1 // pred_check
      _
    $region27: #{tpu_custom_call.1} parent=1 // pred_check_branch
      %72 = sbr.rel (0) target = $region29
    $region28: #{tpu_custom_call.1} parent=1 // pred_region
      _
    $region29: #{tpu_custom_call.1} parent=1 // pred_fallthru
      _
    // Predicated region
    $region30: #{tpu_custom_call.1} parent=1 // pred_check
      _
    $region31: #{tpu_custom_call.1} parent=1 // pred_check_branch
      %74 = sbr.rel (0) target = $region33
    $region32: #{tpu_custom_call.1} parent=1 // pred_region
      _
    $region33: #{tpu_custom_call.1} parent=1 // pred_fallthru
      _
    // Predicated region
    $region34: #{tpu_custom_call.1} parent=1 // pred_check
      _
    $region35: #{tpu_custom_call.1} parent=1 // pred_check_branch
      %76 = sbr.rel (0) target = $region37
    $region36: #{tpu_custom_call.1} parent=1 // pred_region
      %77 = dma.done [#allocation4], 32
    $region37: #{tpu_custom_call.1} parent=1 // pred_fallthru
      _
    // Predicated region
    $region38: #{tpu_custom_call.1} parent=1 // pred_check
      _
    $region39: #{tpu_custom_call.1} parent=1 // pred_check_branch
      %79 = sbr.rel (0) target = $region41
    $region40: #{tpu_custom_call.1} parent=1 // pred_region
      %80 = dma.done [#allocation7], 32
    $region41: #{tpu_custom_call.1} parent=1 // pred_fallthru
      _
    // Predicated region
    $region42: #{tpu_custom_call.1} parent=1 // pred_check
      _
    $region43: #{tpu_custom_call.1} parent=1 // pred_check_branch
      %82 = sbr.rel (0) target = $region45
    $region44: #{tpu_custom_call.1} parent=1 // pred_region
      %83 = dma.done [#allocation7], 4096
    $region45: #{tpu_custom_call.1} parent=1 // pred_fallthru
      _
    // Predicated region
    $region46: #{tpu_custom_call.1} parent=1 // pred_check
      _
    $region47: #{tpu_custom_call.1} parent=1 // pred_check_branch
      %85 = sbr.rel (0) target = $region49
    $region48: #{tpu_custom_call.1} parent=1 // pred_region
      %86 = dma.done [#allocation10], 8192
    $region49: #{tpu_custom_call.1} parent=1 // pred_fallthru
      _
    %v87 = vld [vmem:[%s0] sm:$0x3]
    %v88 = vld [vmem:[#allocation3] sm:$0x3]
    %v89 = vld [vmem:[#allocation6] sm:$0x3]
    %v90 = vld [vmem:[#allocation8] sm:$0xff]
    %v91 = vld [vmem:[#allocation8 + $0x8] sm:$0xff]
    %v92 = vld [vmem:[#allocation8 + $0x10] sm:$0xff]
    %v93 = vld [vmem:[#allocation8 + $0x18] sm:$0xff]
    %v94 = vld [vmem:[#allocation8 + $0x20] sm:$0xff]
    %v95 = vld [vmem:[#allocation8 + $0x28] sm:$0xff]
    %v96 = vld [vmem:[#allocation8 + $0x30] sm:$0xff]
    %v97 = vld [vmem:[#allocation8 + $0x38] sm:$0xff]
    %v98 = vld [vmem:[#allocation8 + $0x40] sm:$0xff]
    %v99 = vld [vmem:[#allocation8 + $0x48] sm:$0xff]
    %v100 = vld [vmem:[#allocation8 + $0x50] sm:$0xff]
    %v101 = vld [vmem:[#allocation8 + $0x58] sm:$0xff]
    %v102 = vld [vmem:[#allocation8 + $0x60] sm:$0xff]
    %v103 = vld [vmem:[#allocation8 + $0x68] sm:$0xff]
    %v104 = vld [vmem:[#allocation8 + $0x70] sm:$0xff]
    %v105 = vld [vmem:[#allocation8 + $0x78] sm:$0xff]
    %v106 = vld [vmem:[#allocation8 + $0x80] sm:$0xff]
    %v107 = vld [vmem:[#allocation8 + $0x88] sm:$0xff]
    %v108 = vld [vmem:[#allocation8 + $0x90] sm:$0xff]
    %v109 = vld [vmem:[#allocation8 + $0x98] sm:$0xff]
    %v110 = vld [vmem:[#allocation8 + $0xa0] sm:$0xff]
    %v111 = vld [vmem:[#allocation8 + $0xa8] sm:$0xff]
    %v112 = vld [vmem:[#allocation8 + $0xb0] sm:$0xff]
    %v113 = vld [vmem:[#allocation8 + $0xb8] sm:$0xff]
    %v114 = vld [vmem:[#allocation8 + $0xc0] sm:$0xff]
    %v115 = vld [vmem:[#allocation8 + $0xc8] sm:$0xff]
    %v116 = vld [vmem:[#allocation8 + $0xd0] sm:$0xff]
    %v117 = vld [vmem:[#allocation8 + $0xd8] sm:$0xff]
    %v118 = vld [vmem:[#allocation8 + $0xe0] sm:$0xff]
    %v119 = vld [vmem:[#allocation8 + $0xe8] sm:$0xff]
    %v120 = vld [vmem:[#allocation8 + $0xf0] sm:$0xff]
    %v121 = vld [vmem:[#allocation8 + $0xf8] sm:$0xff]
    %v122 = vld [vmem:[#allocation9] sm:$0xff]
    %v123 = vld [vmem:[#allocation9 + $0x8] sm:$0xff]
    %v124 = vld [vmem:[#allocation9 + $0x10] sm:$0xff]
    %v125 = vld [vmem:[#allocation9 + $0x18] sm:$0xff]
    %v126 = vld [vmem:[#allocation9 + $0x20] sm:$0xff]
    %v127 = vld [vmem:[#allocation9 + $0x28] sm:$0xff]
    %v128 = vld [vmem:[#allocation9 + $0x30] sm:$0xff]
    %v129 = vld [vmem:[#allocation9 + $0x38] sm:$0xff]
    %v130 = vld [vmem:[#allocation9 + $0x40] sm:$0xff]
    %v131 = vld [vmem:[#allocation9 + $0x48] sm:$0xff]
    %v132 = vld [vmem:[#allocation9 + $0x50] sm:$0xff]
    %v133 = vld [vmem:[#allocation9 + $0x58] sm:$0xff]
    %v134 = vld [vmem:[#allocation9 + $0x60] sm:$0xff]
    %v135 = vld [vmem:[#allocation9 + $0x68] sm:$0xff]
    %v136 = vld [vmem:[#allocation9 + $0x70] sm:$0xff]
    %v137 = vld [vmem:[#allocation9 + $0x78] sm:$0xff]
    %v138 = vld [vmem:[#allocation9 + $0x80] sm:$0xff]
    %v139 = vld [vmem:[#allocation9 + $0x88] sm:$0xff]
    %v140 = vld [vmem:[#allocation9 + $0x90] sm:$0xff]
    %v141 = vld [vmem:[#allocation9 + $0x98] sm:$0xff]
    %v142 = vld [vmem:[#allocation9 + $0xa0] sm:$0xff]
    %v143 = vld [vmem:[#allocation9 + $0xa8] sm:$0xff]
    %v144 = vld [vmem:[#allocation9 + $0xb0] sm:$0xff]
    %v145 = vld [vmem:[#allocation9 + $0xb8] sm:$0xff]
    %v146 = vld [vmem:[#allocation9 + $0xc0] sm:$0xff]
    %v147 = vld [vmem:[#allocation9 + $0xc8] sm:$0xff]
    %v148 = vld [vmem:[#allocation9 + $0xd0] sm:$0xff]
    %v149 = vld [vmem:[#allocation9 + $0xd8] sm:$0xff]
    %v150 = vld [vmem:[#allocation9 + $0xe0] sm:$0xff]
    %v151 = vld [vmem:[#allocation9 + $0xe8] sm:$0xff]
    %v152 = vld [vmem:[#allocation9 + $0xf0] sm:$0xff]
    %v153 = vld [vmem:[#allocation9 + $0xf8] sm:$0xff]
    %v154 = vld [vmem:[#allocation9 + $0x100] sm:$0xff]
    %v155 = vld [vmem:[#allocation9 + $0x108] sm:$0xff]
    %v156 = vld [vmem:[#allocation9 + $0x110] sm:$0xff]
    %v157 = vld [vmem:[#allocation9 + $0x118] sm:$0xff]
    %v158 = vld [vmem:[#allocation9 + $0x120] sm:$0xff]
    %v159 = vld [vmem:[#allocation9 + $0x128] sm:$0xff]
    %v160 = vld [vmem:[#allocation9 + $0x130] sm:$0xff]
    %v161 = vld [vmem:[#allocation9 + $0x138] sm:$0xff]
    %v162 = vld [vmem:[#allocation9 + $0x140] sm:$0xff]
    %v163 = vld [vmem:[#allocation9 + $0x148] sm:$0xff]
    %v164 = vld [vmem:[#allocation9 + $0x150] sm:$0xff]
    %v165 = vld [vmem:[#allocation9 + $0x158] sm:$0xff]
    %v166 = vld [vmem:[#allocation9 + $0x160] sm:$0xff]
    %v167 = vld [vmem:[#allocation9 + $0x168] sm:$0xff]
    %v168 = vld [vmem:[#allocation9 + $0x170] sm:$0xff]
    %v169 = vld [vmem:[#allocation9 + $0x178] sm:$0xff]
    %v170 = vld [vmem:[#allocation9 + $0x180] sm:$0xff]
    %v171 = vld [vmem:[#allocation9 + $0x188] sm:$0xff]
    %v172 = vld [vmem:[#allocation9 + $0x190] sm:$0xff]
    %v173 = vld [vmem:[#allocation9 + $0x198] sm:$0xff]
    %v174 = vld [vmem:[#allocation9 + $0x1a0] sm:$0xff]
    %v175 = vld [vmem:[#allocation9 + $0x1a8] sm:$0xff]
    %v176 = vld [vmem:[#allocation9 + $0x1b0] sm:$0xff]
    %v177 = vld [vmem:[#allocation9 + $0x1b8] sm:$0xff]
    %v178 = vld [vmem:[#allocation9 + $0x1c0] sm:$0xff]
    %v179 = vld [vmem:[#allocation9 + $0x1c8] sm:$0xff]
    %v180 = vld [vmem:[#allocation9 + $0x1d0] sm:$0xff]
    %v181 = vld [vmem:[#allocation9 + $0x1d8] sm:$0xff]
    %v182 = vld [vmem:[#allocation9 + $0x1e0] sm:$0xff]
    %v183 = vld [vmem:[#allocation9 + $0x1e8] sm:$0xff]
    %v184 = vld [vmem:[#allocation9 + $0x1f0] sm:$0xff]
    %v185 = vld [vmem:[#allocation9 + $0x1f8] sm:$0xff]
    %186 = vmatprep.subr.mxu0 %v183
    %187 = vmatpush1.msra.mxu0 %v182
    %188 = vmatprep.subr.mxu0 %v179
    %189 = vmatpush1.msra.mxu0 %v178
    %190 = vmatprep.subr.mxu0 %v175
    %191 = vmatpush1.msra.mxu0 %v174
    %192 = vmatprep.subr.mxu0 %v171
    %193 = vmatpush1.msra.mxu0 %v170
    %194 = vmatprep.subr.mxu0 %v167
    %195 = vmatpush1.msra.mxu0 %v166
    %196 = vmatprep.subr.mxu0 %v163
    %197 = vmatpush1.msra.mxu0 %v162
    %198 = vmatprep.subr.mxu0 %v159
    %199 = vmatpush1.msra.mxu0 %v158
    %200 = vmatprep.subr.mxu0 %v155
    %201 = vmatpush1.msra.mxu0 %v154
    %202 = vmatprep.subr.mxu0 %v151
    %203 = vmatpush1.msra.mxu0 %v150
    %204 = vmatprep.subr.mxu0 %v147
    %205 = vmatpush1.msra.mxu0 %v146
    %206 = vmatprep.subr.mxu0 %v143
    %207 = vmatpush1.msra.mxu0 %v142
    %208 = vmatprep.subr.mxu0 %v139
    %209 = vmatpush1.msra.mxu0 %v138
    %210 = vmatprep.subr.mxu0 %v135
    %211 = vmatpush1.msra.mxu0 %v134
    %212 = vmatprep.subr.mxu0 %v131
    %213 = vmatpush1.msra.mxu0 %v130
    %214 = vmatprep.subr.mxu0 %v127
    %215 = vmatpush1.msra.mxu0 %v126
    %216 = vmatprep.subr.mxu0 %v123
    %217 = vmatpush1.msra.mxu0 %v122
    %218 = vmatprep.subr.mxu0 0.0
    %219 = vmatpush2.msra.mxu0 0.0
    %220 = vmatprep.subr.mxu0 0.0
    %221 = vmatpush2.msra.mxu0 0.0
    %222 = vmatprep.subr.mxu0 0.0
    %223 = vmatpush2.msra.mxu0 0.0
    %224 = vmatprep.subr.mxu0 0.0
    %225 = vmatpush2.msra.mxu0 0.0
    %226 = vmatprep.subr.mxu0 0.0
    %227 = vmatpush2.msra.mxu0 0.0
    %228 = vmatprep.subr.mxu0 0.0
    %229 = vmatpush2.msra.mxu0 0.0
    %230 = vmatprep.subr.mxu0 0.0
    %231 = vmatpush2.msra.mxu0 0.0
    %232 = vmatprep.subr.mxu0 0.0
    %233 = vmatpush2.msra.mxu0 0.0
    %234 = vmatprep.subr.mxu0 0.0
    %235 = vmatpush2.msra.mxu0 0.0
    %236 = vmatprep.subr.mxu0 0.0
    %237 = vmatpush2.msra.mxu0 0.0
    %238 = vmatprep.subr.mxu0 0.0
    %239 = vmatpush2.msra.mxu0 0.0
    %240 = vmatprep.subr.mxu0 0.0
    %241 = vmatpush2.msra.mxu0 0.0
    %242 = vmatprep.subr.mxu0 0.0
    %243 = vmatpush2.msra.mxu0 0.0
    %244 = vmatprep.subr.mxu0 0.0
    %245 = vmatpush2.msra.mxu0 0.0
    %246 = vmatprep.subr.mxu0 0.0
    %247 = vmatpush2.msra.mxu0 0.0
    %248 = vmatprep.subr.mxu0 0.0
    %249 = vmatpush2.msra.mxu0 0.0
    %250 = vmatprep.mubr.f32.mxu0 0.0
    %251 = vmatmul.mubr.f32.gmra.mxu0 %v88
    %v252 = vpop.f32.mrf.mxu0
    %v253 = vadd.f32 0.0, %v252
    %v254 = vpop.f32.mrf.mxu0
    %v255 = vadd.f32 0.0, %v254
    %256 = vdwg.mxu0
    %257 = vmatprep.subr.mxu0 %v185
    %258 = vmatpush1.msra.mxu0 %v184
    %259 = vmatprep.subr.mxu0 %v181
    %260 = vmatpush1.msra.mxu0 %v180
    %261 = vmatprep.subr.mxu0 %v177
    %262 = vmatpush1.msra.mxu0 %v176
    %263 = vmatprep.subr.mxu0 %v173
    %264 = vmatpush1.msra.mxu0 %v172
    %265 = vmatprep.subr.mxu0 %v169
    %266 = vmatpush1.msra.mxu0 %v168
    %267 = vmatprep.subr.mxu0 %v165
    %268 = vmatpush1.msra.mxu0 %v164
    %269 = vmatprep.subr.mxu0 %v161
    %270 = vmatpush1.msra.mxu0 %v160
    %271 = vmatprep.subr.mxu0 %v157
    %272 = vmatpush1.msra.mxu0 %v156
    %273 = vmatprep.subr.mxu0 %v153
    %274 = vmatpush1.msra.mxu0 %v152
    %275 = vmatprep.subr.mxu0 %v149
    %276 = vmatpush1.msra.mxu0 %v148
    %277 = vmatprep.subr.mxu0 %v145
    %278 = vmatpush1.msra.mxu0 %v144
    %279 = vmatprep.subr.mxu0 %v141
    %280 = vmatpush1.msra.mxu0 %v140
    %281 = vmatprep.subr.mxu0 %v137
    %282 = vmatpush1.msra.mxu0 %v136
    %283 = vmatprep.subr.mxu0 %v133
    %284 = vmatpush1.msra.mxu0 %v132
    %285 = vmatprep.subr.mxu0 %v129
    %286 = vmatpush1.msra.mxu0 %v128
    %287 = vmatprep.subr.mxu0 %v125
    %288 = vmatpush1.msra.mxu0 %v124
    %289 = vmatprep.subr.mxu0 0.0
    %290 = vmatpush2.msra.mxu0 0.0
    %291 = vmatprep.subr.mxu0 0.0
    %292 = vmatpush2.msra.mxu0 0.0
    %293 = vmatprep.subr.mxu0 0.0
    %294 = vmatpush2.msra.mxu0 0.0
    %295 = vmatprep.subr.mxu0 0.0
    %296 = vmatpush2.msra.mxu0 0.0
    %297 = vmatprep.subr.mxu0 0.0
    %298 = vmatpush2.msra.mxu0 0.0
    %299 = vmatprep.subr.mxu0 0.0
    %300 = vmatpush2.msra.mxu0 0.0
    %301 = vmatprep.subr.mxu0 0.0
    %302 = vmatpush2.msra.mxu0 0.0
    %303 = vmatprep.subr.mxu0 0.0
    %304 = vmatpush2.msra.mxu0 0.0
    %305 = vmatprep.subr.mxu0 0.0
    %306 = vmatpush2.msra.mxu0 0.0
    %307 = vmatprep.subr.mxu0 0.0
    %308 = vmatpush2.msra.mxu0 0.0
    %309 = vmatprep.subr.mxu0 0.0
    %310 = vmatpush2.msra.mxu0 0.0
    %311 = vmatprep.subr.mxu0 0.0
    %312 = vmatpush2.msra.mxu0 0.0
    %313 = vmatprep.subr.mxu0 0.0
    %314 = vmatpush2.msra.mxu0 0.0
    %315 = vmatprep.subr.mxu0 0.0
    %316 = vmatpush2.msra.mxu0 0.0
    %317 = vmatprep.subr.mxu0 0.0
    %318 = vmatpush2.msra.mxu0 0.0
    %319 = vmatprep.subr.mxu0 0.0
    %320 = vmatpush2.msra.mxu0 0.0
    %321 = vmatprep.mubr.f32.mxu0 0.0
    %322 = vmatmul.mubr.f32.gmra.mxu0 %v88
    %v323 = vpop.f32.mrf.mxu0
    %v324 = vadd.f32 0.0, %v323
    %v325 = vpop.f32.mrf.mxu0
    %v326 = vadd.f32 0.0, %v325
    %327 = vdwg.mxu0
    %vm328 = vcmask 523264
    %v330 = vsel %vm328, %v87, 0
    %332 = vmatprep.subr.mxu0 0.0
    %333 = vmatpush1.msra.mxu0 0.0
    %334 = vmatprep.subr.mxu0 0.0
    %335 = vmatpush1.msra.mxu0 0.0
    %336 = vmatprep.subr.mxu0 0.0
    %337 = vmatpush1.msra.mxu0 0.0
    %338 = vmatprep.subr.mxu0 0.0
    %339 = vmatpush1.msra.mxu0 0.0
    %340 = vmatprep.subr.mxu0 0.0
    %341 = vmatpush1.msra.mxu0 0.0
    %342 = vmatprep.subr.mxu0 0.0
    %343 = vmatpush1.msra.mxu0 0.0
    %344 = vmatprep.subr.mxu0 0.0
    %345 = vmatpush1.msra.mxu0 0.0
    %346 = vmatprep.subr.mxu0 0.0
    %347 = vmatpush1.msra.mxu0 0.0
    %348 = vmatprep.subr.mxu0 %v119
    %349 = vmatpush1.msra.mxu0 %v118
    %350 = vmatprep.subr.mxu0 %v115
    %351 = vmatpush1.msra.mxu0 %v114
    %352 = vmatprep.subr.mxu0 %v111
    %353 = vmatpush1.msra.mxu0 %v110
    %354 = vmatprep.subr.mxu0 %v107
    %355 = vmatpush1.msra.mxu0 %v106
    %356 = vmatprep.subr.mxu0 %v103
    %357 = vmatpush1.msra.mxu0 %v102
    %358 = vmatprep.subr.mxu0 %v99
    %359 = vmatpush1.msra.mxu0 %v98
    %360 = vmatprep.subr.mxu0 %v95
    %361 = vmatpush1.msra.mxu0 %v94
    %362 = vmatprep.subr.mxu0 %v91
    %363 = vmatpush1.msra.mxu0 %v90
    %364 = vmatprep.subr.mxu0 0.0
    %365 = vmatpush2.msra.mxu0 0.0
    %366 = vmatprep.subr.mxu0 0.0
    %367 = vmatpush2.msra.mxu0 0.0
    %368 = vmatprep.subr.mxu0 0.0
    %369 = vmatpush2.msra.mxu0 0.0
    %370 = vmatprep.subr.mxu0 0.0
    %371 = vmatpush2.msra.mxu0 0.0
    %372 = vmatprep.subr.mxu0 0.0
    %373 = vmatpush2.msra.mxu0 0.0
    %374 = vmatprep.subr.mxu0 0.0
    %375 = vmatpush2.msra.mxu0 0.0
    %376 = vmatprep.subr.mxu0 0.0
    %377 = vmatpush2.msra.mxu0 0.0
    %378 = vmatprep.subr.mxu0 0.0
    %379 = vmatpush2.msra.mxu0 0.0
    %380 = vmatprep.subr.mxu0 0.0
    %381 = vmatpush2.msra.mxu0 0.0
    %382 = vmatprep.subr.mxu0 0.0
    %383 = vmatpush2.msra.mxu0 0.0
    %384 = vmatprep.subr.mxu0 0.0
    %385 = vmatpush2.msra.mxu0 0.0
    %386 = vmatprep.subr.mxu0 0.0
    %387 = vmatpush2.msra.mxu0 0.0
    %388 = vmatprep.subr.mxu0 0.0
    %389 = vmatpush2.msra.mxu0 0.0
    %390 = vmatprep.subr.mxu0 0.0
    %391 = vmatpush2.msra.mxu0 0.0
    %392 = vmatprep.subr.mxu0 0.0
    %393 = vmatpush2.msra.mxu0 0.0
    %394 = vmatprep.subr.mxu0 0.0
    %395 = vmatpush2.msra.mxu0 0.0
    %396 = vmatprep.mubr.f32.mxu0 0.0
    %397 = vmatmul.mubr.f32.gmra.mxu0 %v330
    %v398 = vpop.f32.mrf.mxu0
    %v399 = vadd.f32 %v253, %v398
    %v400 = vpop.f32.mrf.mxu0
    %v401 = vadd.f32 %v255, %v400
    %402 = vdwg.mxu0
    %403 = vmatprep.subr.mxu0 0.0
    %404 = vmatpush1.msra.mxu0 0.0
    %405 = vmatprep.subr.mxu0 0.0
    %406 = vmatpush1.msra.mxu0 0.0
    %407 = vmatprep.subr.mxu0 0.0
    %408 = vmatpush1.msra.mxu0 0.0
    %409 = vmatprep.subr.mxu0 0.0
    %410 = vmatpush1.msra.mxu0 0.0
    %411 = vmatprep.subr.mxu0 0.0
    %412 = vmatpush1.msra.mxu0 0.0
    %413 = vmatprep.subr.mxu0 0.0
    %414 = vmatpush1.msra.mxu0 0.0
    %415 = vmatprep.subr.mxu0 0.0
    %416 = vmatpush1.msra.mxu0 0.0
    %417 = vmatprep.subr.mxu0 0.0
    %418 = vmatpush1.msra.mxu0 0.0
    %419 = vmatprep.subr.mxu0 %v121
    %420 = vmatpush1.msra.mxu0 %v120
    %421 = vmatprep.subr.mxu0 %v117
    %422 = vmatpush1.msra.mxu0 %v116
    %423 = vmatprep.subr.mxu0 %v113
    %424 = vmatpush1.msra.mxu0 %v112
    %425 = vmatprep.subr.mxu0 %v109
    %426 = vmatpush1.msra.mxu0 %v108
    %427 = vmatprep.subr.mxu0 %v105
    %428 = vmatpush1.msra.mxu0 %v104
    %429 = vmatprep.subr.mxu0 %v101
    %430 = vmatpush1.msra.mxu0 %v100
    %431 = vmatprep.subr.mxu0 %v97
    %432 = vmatpush1.msra.mxu0 %v96
    %433 = vmatprep.subr.mxu0 %v93
    %434 = vmatpush1.msra.mxu0 %v92
    %435 = vmatprep.subr.mxu0 0.0
    %436 = vmatpush2.msra.mxu0 0.0
    %437 = vmatprep.subr.mxu0 0.0
    %438 = vmatpush2.msra.mxu0 0.0
    %439 = vmatprep.subr.mxu0 0.0
    %440 = vmatpush2.msra.mxu0 0.0
    %441 = vmatprep.subr.mxu0 0.0
    %442 = vmatpush2.msra.mxu0 0.0
    %443 = vmatprep.subr.mxu0 0.0
    %444 = vmatpush2.msra.mxu0 0.0
    %445 = vmatprep.subr.mxu0 0.0
    %446 = vmatpush2.msra.mxu0 0.0
    %447 = vmatprep.subr.mxu0 0.0
    %448 = vmatpush2.msra.mxu0 0.0
    %449 = vmatprep.subr.mxu0 0.0
    %450 = vmatpush2.msra.mxu0 0.0
    %451 = vmatprep.subr.mxu0 0.0
    %452 = vmatpush2.msra.mxu0 0.0
    %453 = vmatprep.subr.mxu0 0.0
    %454 = vmatpush2.msra.mxu0 0.0
    %455 = vmatprep.subr.mxu0 0.0
    %456 = vmatpush2.msra.mxu0 0.0
    %457 = vmatprep.subr.mxu0 0.0
    %458 = vmatpush2.msra.mxu0 0.0
    %459 = vmatprep.subr.mxu0 0.0
    %460 = vmatpush2.msra.mxu0 0.0
    %461 = vmatprep.subr.mxu0 0.0
    %462 = vmatpush2.msra.mxu0 0.0
    %463 = vmatprep.subr.mxu0 0.0
    %464 = vmatpush2.msra.mxu0 0.0
    %465 = vmatprep.subr.mxu0 0.0
    %466 = vmatpush2.msra.mxu0 0.0
    %467 = vmatprep.mubr.f32.mxu0 0.0
    %468 = vmatmul.mubr.f32.gmra.mxu0 %v330
    %v469 = vpop.f32.mrf.mxu0
    %v470 = vadd.f32 %v324, %v469
    %v471 = vpop.f32.mrf.mxu0
    %v472 = vadd.f32 %v326, %v471
    %473 = vdwg.mxu0
    %v474 = vld [vmem:[%s5] sm:$0xf]
    %v476 = vlaneseq
    %v477 = vshrl.u32 %v476, 7
    %v478 = vsub.s32 0, %v477
    %v479 = vrot.slane %v474, %v478
    %v480 = vlaneseq
    %v481 = vshrl.u32 %v480, 7
    %v482 = vsub.s32 1, %v481
    %v483 = vrot.slane %v474, %v482
    %v484 = vlaneseq
    %v485 = vshrl.u32 %v484, 7
    %v486 = vsub.s32 2, %v485
    %v487 = vrot.slane %v474, %v486
    %v488 = vlaneseq
    %v489 = vshrl.u32 %v488, 7
    %v490 = vsub.s32 3, %v489
    %v491 = vrot.slane %v474, %v490
    %v496 = vadd.f32 %v399, %v479
    %v497 = vadd.f32 %v401, %v483
    %v498 = vadd.f32 %v470, %v487
    %v499 = vadd.f32 %v472, %v491
    %v500 = vsub.f32 0.0, %v496
    %v501 = vmul.f32 %v500, 1.442695
    %v502 = vpow.pop %v501
    %v503 = vadd.f32 %v502, 1.0
    %v504 = vrcp.pop %v503
    %v505 = vmul.f32 1.0, %v504
    %v506 = vsub.f32 0.0, %v497
    %v507 = vmul.f32 %v506, 1.442695
    %v508 = vpow.pop %v507
    %v509 = vadd.f32 %v508, 1.0
    %v510 = vrcp.pop %v509
    %v511 = vmul.f32 1.0, %v510
    %v512 = vtanh.pop %v498
    %v513 = vsub.f32 0.0, %v499
    %v514 = vmul.f32 %v513, 1.442695
    %v515 = vpow.pop %v514
    %v516 = vadd.f32 %v515, 1.0
    %v517 = vrcp.pop %v516
    %v518 = vmul.f32 1.0, %v517
    %v519 = vmul.f32 %v511, %v89
    %v520 = vmul.f32 %v505, %v512
    %v521 = vadd.f32 %v519, %v520
    %v522 = vtanh.pop %v521
    %v523 = vmul.f32 %v518, %v522
    %524 = vst [vmem:[#allocation11] sm:$0x3] %v523
    %525 = vst [vmem:[#allocation12] sm:$0x3] %v521
    %v526 = vmax.f32 %v523, 0.0
    %v527 = vld [vmem:[%s6] sm:$0x1]
    %v529 = vlaneseq
    %v530 = vshrl.u32 %v529, 7
    %v531 = vsub.s32 0, %v530
    %v532 = vrot.slane %v527, %v531
    %v534 = vmul.f32 %v526, %v532
    %vm535 = vcmask 1041408
    %v536 = vsel %vm535, %v534, 0.0
    %537 = vadd.xlane.f32.xlu0 %v536
    %v538 = vpop.xlane.xlu0 %537
    %v539 = vld [vmem:[#allocation2] sm:$0x1]
    %v541 = vlaneseq
    %v542 = vshrl.u32 %v541, 7
    %v543 = vsub.s32 0, %v542
    %v544 = vrot.slane %v539, %v543
    %v546 = vadd.f32 %v538, %v544
    %v547 = vsub.f32 0.0, %v546
    %v548 = vmul.f32 %v547, 1.442695
    %v549 = vpow.pop %v548
    %v550 = vadd.f32 %v549, 1.0
    %v551 = vrcp.pop %v550
    %v552 = vmul.f32 1.0, %v551
    %vm553 = vcmask 1024
    %554 = vst.msk [vmem:[%s8] sm:$0x3] %vm553, %v552
    // Predicated region
    $region50: #{tpu_custom_call.1} parent=1 // pred_check
      _
    $region51: #{tpu_custom_call.1} parent=1 // pred_check_branch
      %556 = sbr.rel (0) target = $region53
    $region52: #{tpu_custom_call.1} parent=1 // pred_region
      _
    $region53: #{tpu_custom_call.1} parent=1 // pred_fallthru
      _
    // Predicated region
    $region54: #{tpu_custom_call.1} parent=1 // pred_check
      _
    $region55: #{tpu_custom_call.1} parent=1 // pred_check_branch
      %558 = sbr.rel (0) target = $region57
    $region56: #{tpu_custom_call.1} parent=1 // pred_region
      %s560 = ssub.s32 32, 32
      %561 = vsyncadd [#allocation5], %s560
      %s563 = sshll.u32 [#allocation11], 4
      %s564 = int_to_ptr.vmem [resolvable:$true] %s563
      %566 = dma.vmem_to_hbm [thread:$0]  %s564, 32, %s9, [#allocation5]
    $region57: #{tpu_custom_call.1} parent=1 // pred_fallthru
      _
    // Predicated region
    $region58: #{tpu_custom_call.1} parent=1 // pred_check
      _
    $region59: #{tpu_custom_call.1} parent=1 // pred_check_branch
      %568 = sbr.rel (0) target = $region61
    $region60: #{tpu_custom_call.1} parent=1 // pred_region
      %s570 = ssub.s32 32, 32
      %571 = vsyncadd [#allocation13], %s570
      %s573 = sshll.u32 [#allocation12], 4
      %s574 = int_to_ptr.vmem [resolvable:$true] %s573
      %576 = dma.vmem_to_hbm [thread:$0]  %s574, 32, %s10, [#allocation13]
    $region61: #{tpu_custom_call.1} parent=1 // pred_fallthru
      _
    // Predicated region
    $region62: #{tpu_custom_call.1} parent=1 // pred_check
      _
    $region63: #{tpu_custom_call.1} parent=1 // pred_check_branch
      %578 = sbr.rel (0) target = $region65
    $region64: #{tpu_custom_call.1} parent=1 // pred_region
      _
    $region65: #{tpu_custom_call.1} parent=1 // pred_fallthru
      _
    // Predicated region
    $region66: #{tpu_custom_call.1} parent=1 // pred_check
      _
    $region67: #{tpu_custom_call.1} parent=1 // pred_check_branch
      %580 = sbr.rel (0) target = $region69
    $region68: #{tpu_custom_call.1} parent=1 // pred_region
      %581 = dma.done [#allocation5], 32
    $region69: #{tpu_custom_call.1} parent=1 // pred_fallthru
      _
    // Predicated region
    $region70: #{tpu_custom_call.1} parent=1 // pred_check
      _
    $region71: #{tpu_custom_call.1} parent=1 // pred_check_branch
      %583 = sbr.rel (0) target = $region73
    $region72: #{tpu_custom_call.1} parent=1 // pred_region
      %584 = dma.done [#allocation13], 32
    $region73: #{tpu_custom_call.1} parent=1 // pred_fallthru
      _
    %585 = vsyncpa [#allocation4], 1
    %586 = vsyncpa [#allocation7], 1
    %587 = vsyncpa [#allocation10], 1
    %588 = vsyncpa [#allocation5], 1
    %589 = vsyncpa [#allocation13], 1

</llo_original>
